<compile_context>
chip_gen: v7x
topology: tpu7x:2x2x1
jax: 0.10.0
libtpu: 0.0.40
codegen_flags: <defaults>
</compile_context>

<pallas_src>
import jax
import jax.numpy as jnp
from jax.experimental import pallas as pl
from jax.experimental.pallas import tpu as pltpu


def _round_up(x, m):
    return ((x + m - 1) // m) * m


def feature_block_kernel(x_ref, w_ref, b_ref, o_ref):
    """One batch tile: single wide MXU matmul over the concatenated branches, epilogue in-register.

    x_ref: [TM, in_f]      bf16
    w_ref: [in_f, 2*N]     bf16   (columns 0:N = BN-folded main Linear, N:2N = shortcut Linear)
    b_ref: [1, 2*N]        f32    (folded biases)
    o_ref: [TM, N]         f32
    """
    acc = jnp.dot(x_ref[...], w_ref[...], preferred_element_type=jnp.float32)  # [TM, 2*N] f32
    acc = acc + b_ref[...]
    n = o_ref.shape[-1]                      # N (multiple of 128 -> lane-tile aligned split)
    h = jnp.maximum(acc[:, :n], 0.0)         # main branch: Linear+BN folded, then ReLU
    s = acc[:, n:]                           # shortcut branch: Linear
    o_ref[...] = (h + s).astype(o_ref.dtype)


def prepare_params(params, eps=1e-5):
    """One-time parameter prep (hoisted out of the per-call path).

    Folds BatchNorm (eval) into the main Linear, pre-transposes both weight matrices,
    pads out_features to a multiple of 128, concatenates the branches, and casts to bf16.
    """
    out_f, in_f = params["w"].shape
    out_f_p = _round_up(out_f, 128)

    inv_std = 1.0 / jnp.sqrt(params["bn_var"] + eps)
    scale = params["bn_gamma"] * inv_std                                   # [out_f]
    # relu(((x @ W^T + b) - mean) * scale + beta) == relu(x @ (W^T * scale) + b')
    w_main = params["w"].T * scale[None, :]                                # [in_f, out_f]
    b_main = (params["b"] - params["bn_mean"]) * scale + params["bn_beta"]  # [out_f]
    w_short = params["ws"].T                                               # [in_f, out_f]
    b_short = params["bs"]                                                 # [out_f]

    pad = out_f_p - out_f
    if pad:
        w_main = jnp.pad(w_main, ((0, 0), (0, pad)))
        w_short = jnp.pad(w_short, ((0, 0), (0, pad)))
        b_main = jnp.pad(b_main, ((0, pad),))
        b_short = jnp.pad(b_short, ((0, pad),))

    w_cat = jnp.concatenate([w_main, w_short], axis=1).astype(jnp.bfloat16)   # [in_f, 2*out_f_p]
    b_cat = jnp.concatenate([b_main, b_short])[None, :].astype(jnp.float32)   # [1, 2*out_f_p]

    return {
        "w_cat": w_cat,
        "b_cat": b_cat,
        "in_features": in_f,
        "out_features": out_f,
        "out_features_padded": out_f_p,
    }


def feature_block_forward(x, prepared, *, tm=512):
    """x: [B, in_features] float32 -> [B, out_features] float32 (eval-mode forward)."""
    B, in_f = x.shape
    assert in_f == prepared["in_features"]
    out_f = prepared["out_features"]
    out_f_p = prepared["out_features_padded"]
    n2 = 2 * out_f_p

    # Batch tile: multiple of 16 (bf16 sublane packing), capped at `tm`; pad B up to a tile multiple.
    TM = min(tm, _round_up(B, 16))
    B_p = _round_up(B, TM)
    if B_p != B:
        x = jnp.pad(x, ((0, B_p - B), (0, 0)))
    x_bf = x.astype(jnp.bfloat16)

    # VMEM budget: double-buffered x/out tiles + resident weights/bias, with 2x headroom, <= 64 MiB.
    est = (2 * TM * in_f * 2          # x tiles, bf16, double-buffered
           + in_f * n2 * 2            # resident concatenated weights, bf16
           + 2 * n2 * 4               # bias row, f32
           + 2 * TM * out_f_p * 4)    # out tiles, f32, double-buffered
    vmem_limit = int(min(max(2 * est, 16 << 20), 64 << 20))

    out_p = pl.pallas_call(
        feature_block_kernel,
        out_shape=jax.ShapeDtypeStruct((B_p, out_f_p), jnp.float32),
        grid=(B_p // TM,),
        in_specs=[
            pl.BlockSpec((TM, in_f), lambda i: (i, 0)),    # x: streamed per batch tile
            pl.BlockSpec((in_f, n2), lambda i: (0, 0)),    # concatenated weights: VMEM-resident
            pl.BlockSpec((1, n2), lambda i: (0, 0)),       # concatenated biases: VMEM-resident
        ],
        out_specs=pl.BlockSpec((TM, out_f_p), lambda i: (i, 0)),
        compiler_params=pltpu.CompilerParams(
            dimension_semantics=("parallel",),
            vmem_limit_bytes=vmem_limit,
        ),
    )(x_bf, prepared["w_cat"], prepared["b_cat"])

    return out_p[:B, :out_f]


def init_params(key, in_features, out_features):
    """Deterministic init matching the PyTorch module's parameter shapes."""
    k1, k2, k3, k4 = jax.random.split(key, 4)
    bound = 1.0 / jnp.sqrt(jnp.float32(in_features))
    return {
        # block[0]: nn.Linear(in_features, out_features)
        "w": jax.random.uniform(k1, (out_features, in_features), jnp.float32, -bound, bound),
        "b": jax.random.uniform(k2, (out_features,), jnp.float32, -bound, bound),
        # block[1]: nn.BatchNorm1d(out_features) -- PyTorch defaults
        "bn_gamma": jnp.ones((out_features,), jnp.float32),
        "bn_beta": jnp.zeros((out_features,), jnp.float32),
        "bn_mean": jnp.zeros((out_features,), jnp.float32),
        "bn_var": jnp.ones((out_features,), jnp.float32),
        # shortcut: nn.Linear(in_features, out_features) (in != out)
        "ws": jax.random.uniform(k3, (out_features, in_features), jnp.float32, -bound, bound),
        "bs": jax.random.uniform(k4, (out_features,), jnp.float32, -bound, bound),
    }


def reference_forward(x, params):
    """Pure-JAX f32 reference of the eval-mode PyTorch forward."""
    eps = 1e-5
    h = x @ params["w"].T + params["b"]
    h = (h - params["bn_mean"]) / jnp.sqrt(params["bn_var"] + eps)
    h = h * params["bn_gamma"] + params["bn_beta"]
    h = jnp.maximum(h, 0.0)
    s = x @ params["ws"].T + params["bs"]
    return h + s


if __name__ == "__main__":
    B, in_features, out_features = 8, 32, 64

    key = jax.random.PRNGKey(0)
    kx, kp = jax.random.split(key)
    x = jax.random.normal(kx, (B, in_features), jnp.float32)
    params = init_params(kp, in_features, out_features)

    prepared = prepare_params(params)          # one-time weight fold/transpose/concat/cast

    out = feature_block_forward(x, prepared)
    out = jax.block_until_ready(out)

    ref = reference_forward(x, params)
    assert out.shape == (B, out_features)
    # bf16 weights/activations with f32 accumulation -> tolerance relaxed accordingly.
    assert jnp.allclose(out, ref, atol=2e-2, rtol=2e-2), "mismatch vs reference"

    print("KERNEL_OK")
</pallas_src>

<mosaic_0001>
module attributes {stable_mosaic.version = 11 : i64} {
  func.func @feature_block_kernel(%arg0: i32, %arg1: memref<16x32xbf16, #tpu.memory_space<vmem>>, %arg2: memref<32x256xbf16, #tpu.memory_space<vmem>>, %arg3: memref<1x256xf32, #tpu.memory_space<vmem>>, %arg4: memref<16x128xf32, #tpu.memory_space<vmem>>) attributes {dimension_semantics = [#tpu.dimension_semantics<parallel>], iteration_bounds = array<i64: 1>, scalar_prefetch = 0 : i64, scratch_operands = 0 : i64, tpu.core_type = #tpu.core_type<tc>, window_params = [{transform_indices = @transform_0, window_bounds = array<i64: 16, 32>}, {pipeline_mode = #tpu.pipeline_mode<synchronous>, transform_indices = @transform_1, window_bounds = array<i64: 32, 256>}, {pipeline_mode = #tpu.pipeline_mode<synchronous>, transform_indices = @transform_2, window_bounds = array<i64: 1, 256>}, {transform_indices = @transform_3, window_bounds = array<i64: 16, 128>}]} {
    %c0 = arith.constant 0 : index
    %c0_0 = arith.constant 0 : index
    %0 = vector.load %arg1[%c0, %c0_0] : memref<16x32xbf16, #tpu.memory_space<vmem>>, vector<16x32xbf16>
    %c0_1 = arith.constant 0 : index
    %c0_2 = arith.constant 0 : index
    %1 = vector.load %arg2[%c0_1, %c0_2] : memref<32x256xbf16, #tpu.memory_space<vmem>>, vector<32x256xbf16>
    %cst = arith.constant dense<0.000000e+00> : vector<16x256xf32>
    %2 = tpu.matmul %0, %1, %cst {dimension_numbers = #tpu.dot_dimension_numbers<[1], [0], [0], [1], [0, 0, 1, 1], [], []>} : vector<16x32xbf16>, vector<32x256xbf16>, vector<16x256xf32> -> vector<16x256xf32>
    %c0_3 = arith.constant 0 : index
    %c0_4 = arith.constant 0 : index
    %3 = vector.load %arg3[%c0_3, %c0_4] : memref<1x256xf32, #tpu.memory_space<vmem>>, vector<1x256xf32>
    %4 = vector.broadcast %3 : vector<1x256xf32> to vector<16x256xf32>
    %5 = arith.addf %2, %4 : vector<16x256xf32>
    %6 = vector.extract_strided_slice %5 {offsets = [0, 0], sizes = [16, 128], strides = [1, 1]} : vector<16x256xf32> to vector<16x128xf32>
    %cst_5 = arith.constant 0.000000e+00 : f32
    %7 = vector.broadcast %cst_5 : f32 to vector<16x128xf32>
    %8 = arith.maximumf %6, %7 : vector<16x128xf32>
    %9 = vector.extract_strided_slice %5 {offsets = [0, 128], sizes = [16, 128], strides = [1, 1]} : vector<16x256xf32> to vector<16x128xf32>
    %10 = arith.addf %8, %9 : vector<16x128xf32>
    %c0_6 = arith.constant 0 : index
    %c0_7 = arith.constant 0 : index
    %11 = vector.load %arg4[%c0_6, %c0_7] : memref<16x128xf32, #tpu.memory_space<vmem>>, vector<16x128xf32>
    tpu.vector_store %arg4[%c0_6, %c0_7], %10 {strides = array<i32>} : memref<16x128xf32, #tpu.memory_space<vmem>>, vector<16x128xf32>,
    return
  }
  func.func @transform_0(%arg0: i32) -> (i32, i32) {
    %c0_i32 = arith.constant 0 : i32
    %c0_i32_0 = arith.constant 0 : i32
    return %arg0, %c0_i32 : i32, i32
  }
  func.func @transform_1(%arg0: i32) -> (i32, i32) {
    %c0_i32 = arith.constant 0 : i32
    %c0_i32_0 = arith.constant 0 : i32
    %c0_i32_1 = arith.constant 0 : i32
    return %c0_i32, %c0_i32_0 : i32, i32
  }
  func.func @transform_2(%arg0: i32) -> (i32, i32) {
    %c0_i32 = arith.constant 0 : i32
    %c0_i32_0 = arith.constant 0 : i32
    %c0_i32_1 = arith.constant 0 : i32
    return %c0_i32, %c0_i32_0 : i32, i32
  }
  func.func @transform_3(%arg0: i32) -> (i32, i32) {
    %c0_i32 = arith.constant 0 : i32
    %c0_i32_0 = arith.constant 0 : i32
    return %arg0, %c0_i32 : i32, i32
  }
}

</mosaic_0001>

<llo_original>
// kernel: tpu_custom_call.1
$region0: #{tpu_custom_call.1}
  #allocation0 [shape = 'u32[]', space=smem, size = 0x4, offset = 0x4, fixed_abs, tag = 'smem constant byte address 0x4 - core index']
  #allocation1 [shape = 'u32[144,128]{1,0:T(1,128)}', space=vmem, size = 0x12000, scoped, tag = 'internal scratch']
  %s0 = inlined_call_operand.hbm [shape: bf16[16,32], index: 0, kind: input, shape index: {}]
  %s1 = inlined_call_operand.hbm [shape: bf16[32,256], index: 1, kind: input, shape index: {}]
  %s2 = inlined_call_operand.vmem [shape: f32[1,256], index: 2, kind: input, shape index: {}]
  %s3 = inlined_call_operand.hbm [shape: f32[16,128], index: 3, kind: output, shape index: {}]
  %s4 = sld [smem:[#allocation0]]
  $region30: #{tpu_custom_call.1} parent=0
    _
  %s6 = ssub.s32 1, %s4
  %s7 = scalar_select 0, %s6, %s4
  $region1: #{tpu_custom_call.1} parent=0
    #allocation2 [shape = 'u8[4096]{0}', space=vmem, size = 0x1000, scoped, tag = 'input window, operand 0, single buffered']
    #allocation3 [shape = 's32[1]{0}', space=sflag, size = 0x4, scoped, tag = 'scoped memory for tpu_custom_call.1']
    #allocation4 [shape = 's32[1]{0}', space=sflag, size = 0x4, scoped, tag = 'scoped memory for tpu_custom_call.1']
    #allocation5 [shape = 'u8[16384]{0}', space=vmem, size = 0x4000, scoped, tag = 'input window, operand 1, single buffered']
    #allocation6 [shape = 's32[1]{0}', space=sflag, size = 0x4, scoped, tag = 'scoped memory for tpu_custom_call.1']
    #allocation7 [shape = 'u8[8192]{0}', space=vmem, size = 0x2000, scoped, tag = 'output window, operand 0, single buffered']
    %8 = vsyncpa [#allocation3], 0
    %9 = vsyncpa [#allocation6], 0
    %10 = vsyncpa [#allocation4], 0
    // Predicated region
    $region2: #{tpu_custom_call.1} parent=1 // pred_check
      _
    $region3: #{tpu_custom_call.1} parent=1 // pred_check_branch
      %12 = sbr.rel (0) target = $region5
    $region4: #{tpu_custom_call.1} parent=1 // pred_region
      %s14 = ssub.s32 128, 128
      %15 = vsyncadd [#allocation3], %s14
      %s16 = sshll.u32 [#allocation2], 4
      %s17 = int_to_ptr.vmem [resolvable:$true] %s16
      %22 = dma.hbm_to_vmem [thread:$0]  %s0, 128, %s17, [#allocation3], 64, 64, 4
    $region5: #{tpu_custom_call.1} parent=1 // pred_fallthru
      _
    // Predicated region
    $region6: #{tpu_custom_call.1} parent=1 // pred_check
      _
    $region7: #{tpu_custom_call.1} parent=1 // pred_check_branch
      %24 = sbr.rel (0) target = $region9
    $region8: #{tpu_custom_call.1} parent=1 // pred_region
      %s26 = ssub.s32 512, 512
      %27 = vsyncadd [#allocation6], %s26
      %s28 = sshll.u32 [#allocation5], 4
      %s29 = int_to_ptr.vmem [resolvable:$true] %s28
      %34 = dma.hbm_to_vmem [thread:$0]  %s1, 512, %s29, [#allocation6], 128, 128, 8
    $region9: #{tpu_custom_call.1} parent=1 // pred_fallthru
      _
    // Predicated region
    $region10: #{tpu_custom_call.1} parent=1 // pred_check
      _
    $region11: #{tpu_custom_call.1} parent=1 // pred_check_branch
      %36 = sbr.rel (0) target = $region13
    $region12: #{tpu_custom_call.1} parent=1 // pred_region
      _
    $region13: #{tpu_custom_call.1} parent=1 // pred_fallthru
      _
    // Predicated region
    $region14: #{tpu_custom_call.1} parent=1 // pred_check
      _
    $region15: #{tpu_custom_call.1} parent=1 // pred_check_branch
      %38 = sbr.rel (0) target = $region17
    $region16: #{tpu_custom_call.1} parent=1 // pred_region
      %39 = dma.done [#allocation3], 128
    $region17: #{tpu_custom_call.1} parent=1 // pred_fallthru
      _
    // Predicated region
    $region18: #{tpu_custom_call.1} parent=1 // pred_check
      _
    $region19: #{tpu_custom_call.1} parent=1 // pred_check_branch
      %41 = sbr.rel (0) target = $region21
    $region20: #{tpu_custom_call.1} parent=1 // pred_region
      %42 = dma.done [#allocation6], 512
    $region21: #{tpu_custom_call.1} parent=1 // pred_fallthru
      _
    %v44 = vld [vmem:[#allocation2] sm:$0xf]
    %v45 = vld [vmem:[#allocation2 + $0x4] sm:$0xf]
    %v46 = vld [vmem:[#allocation5] sm:$0xff]
    %v47 = vld [vmem:[#allocation5 + $0x8] sm:$0xff]
    %v48 = vld [vmem:[#allocation5 + $0x10] sm:$0xff]
    %v49 = vld [vmem:[#allocation5 + $0x18] sm:$0xff]
    %v50 = vld [vmem:[%s2] sm:$0x3]
    %v52 = vlaneseq
    %v53 = vshrl.u32 %v52, 7
    %v54 = vsub.s32 0, %v53
    %v55 = vrot.slane %v50, %v54
    %v56 = vlaneseq
    %v57 = vshrl.u32 %v56, 7
    %v58 = vsub.s32 1, %v57
    %v59 = vrot.slane %v50, %v58
    %v64 = vunpack.c.l.b16 %v44
    %v65 = vunpack.c.l.b16 %v45
    %v66 = vpack.c.b16 %v65, %v64
    %v71 = vunpack.c.l.b16 %v46
    %v72 = vunpack.c.h.b16 %v46
    %v73 = vunpack.c.l.b16 %v47
    %v74 = vunpack.c.h.b16 %v47
    %v75 = vunpack.c.l.b16 %v48
    %v76 = vunpack.c.h.b16 %v48
    %v77 = vunpack.c.l.b16 %v49
    %v78 = vunpack.c.h.b16 %v49
    %v79 = vpack.c.b16 %v73, %v71
    %v80 = vpack.c.b16 %v74, %v72
    %v81 = vpack.c.b16 %v77, %v75
    %v82 = vpack.c.b16 %v78, %v76
    %vm87 = vcmask 261120
    %v89 = vsel %vm87, %v66, 0
    %91 = vmatprep.subr.bf16.mxu0 %v80
    %92 = vmatpush1.bf16.msra.mxu0 %v79
    %93 = vmatprep.subr.bf16.mxu0 %v82
    %94 = vmatpush1.bf16.msra.mxu0 %v81
    %95 = vmatprep.subr.bf16.mxu0 0
    %96 = vmatpush1.bf16.msra.mxu0 0
    %97 = vmatprep.subr.bf16.mxu0 0
    %98 = vmatpush1.bf16.msra.mxu0 0
    %99 = vmatprep.subr.bf16.mxu0 0
    %100 = vmatpush1.bf16.msra.mxu0 0
    %101 = vmatprep.subr.bf16.mxu0 0
    %102 = vmatpush1.bf16.msra.mxu0 0
    %103 = vmatprep.subr.bf16.mxu0 0
    %104 = vmatpush1.bf16.msra.mxu0 0
    %105 = vmatprep.subr.bf16.mxu0 0
    %106 = vmatpush1.bf16.msra.mxu0 0
    %107 = vmatprep.subr.bf16.mxu0 0
    %108 = vmatpush1.bf16.msra.mxu0 0
    %109 = vmatprep.subr.bf16.mxu0 0
    %110 = vmatpush1.bf16.msra.mxu0 0
    %111 = vmatprep.subr.bf16.mxu0 0
    %112 = vmatpush1.bf16.msra.mxu0 0
    %113 = vmatprep.subr.bf16.mxu0 0
    %114 = vmatpush1.bf16.msra.mxu0 0
    %115 = vmatprep.subr.bf16.mxu0 0
    %116 = vmatpush1.bf16.msra.mxu0 0
    %117 = vmatprep.subr.bf16.mxu0 0
    %118 = vmatpush1.bf16.msra.mxu0 0
    %119 = vmatprep.subr.bf16.mxu0 0
    %120 = vmatpush1.bf16.msra.mxu0 0
    %121 = vmatprep.subr.bf16.mxu0 0
    %122 = vmatpush1.bf16.msra.mxu0 0
    %123 = vmatprep.mubr.bf16.mxu0 0
    %124 = vmatmul.mubr.bf16.gmra.mrb[0].mxu0 %v89
    %v125 = vpop.f32.mrb[0].mxu0
    %v126 = vadd.f32 %v55, %v125
    %v127 = vpop.f32.mrb[0].mxu0
    %v128 = vadd.f32 %v59, %v127
    %v129 = vpop.f32.mrb[0].mxu0
    %v130 = vadd.f32 %v55, %v129
    %v131 = vpop.f32.mrb[0].mxu0
    %v132 = vadd.f32 %v59, %v131
    %133 = vdwg.mxu0
    %v134 = vmax.f32 %v126, 0.0
    %v135 = vmax.f32 %v130, 0.0
    %v136 = vadd.f32 %v134, %v128
    %v137 = vadd.f32 %v135, %v132
    %138 = vst [vmem:[#allocation7] sm:$0xff] %v136
    %139 = vst [vmem:[#allocation7 + $0x8] sm:$0xff] %v137
    // Predicated region
    $region22: #{tpu_custom_call.1} parent=1 // pred_check
      _
    $region23: #{tpu_custom_call.1} parent=1 // pred_check_branch
      %141 = sbr.rel (0) target = $region25
    $region24: #{tpu_custom_call.1} parent=1 // pred_region
      %s143 = ssub.s32 256, 256
      %144 = vsyncadd [#allocation4], %s143
      %s145 = sshll.u32 [#allocation7], 4
      %s146 = int_to_ptr.vmem [resolvable:$true] %s145
      %151 = dma.vmem_to_hbm [thread:$0]  %s146, 256, %s3, [#allocation4], 128, 128, 8
    $region25: #{tpu_custom_call.1} parent=1 // pred_fallthru
      _
    // Predicated region
    $region26: #{tpu_custom_call.1} parent=1 // pred_check
      _
    $region27: #{tpu_custom_call.1} parent=1 // pred_check_branch
      %153 = sbr.rel (0) target = $region29
    $region28: #{tpu_custom_call.1} parent=1 // pred_region
      %154 = dma.done [#allocation4], 256
    $region29: #{tpu_custom_call.1} parent=1 // pred_fallthru
      _
    %155 = vsyncpa [#allocation3], 1
    %156 = vsyncpa [#allocation6], 1
    %157 = vsyncpa [#allocation4], 1

</llo_original>
